<compile_context>
chip_gen: v7x
topology: tpu7x:2x2x1
jax: 0.10.0
libtpu: 0.0.40
codegen_flags: <defaults>
</compile_context>

<pallas_src>
import jax
import jax.numpy as jnp
from jax.experimental import pallas as pl
from jax.experimental.pallas import tpu as pltpu


def _mlp_kernel(x_ref, w_ref, b_ref, o_ref):
    """One batch tile of the fused MLP, computed in transposed (feat, TB) layout.

    x_ref: (1, TB)      lane-major batch slice
    w_ref: (4, H, H)    [0]: layer1 weight (out,in=1) in column 0
                        [1],[2]: layer2/3 weights in (out, in) layout
                        [3]: layer4 weight (in-dim on sublanes) in column 0
    b_ref: (H, 4)       column j = bias of layer j+1 (layer-4 bias at [0, 3])
    o_ref: (1, TB)      lane-major output slice
    """
    x = x_ref[...]                                   # (1, TB)
    w = w_ref[...]                                   # (4, H, H), VMEM-resident
    b = b_ref[...]                                   # (H, 4)

    # --- layer 1: in_dim == 1  ->  outer product on the VPU (no MXU pass) ---
    h = jnp.maximum(w[0, :, 0:1] * x + b[:, 0:1], 0.0)          # (H, TB)

    # --- layers 2 & 3: real matmuls on the MXU (weights already (out, in)) ---
    h = jnp.maximum(
        jnp.dot(w[1], h, preferred_element_type=jnp.float32) + b[:, 1:2], 0.0)
    h = jnp.maximum(
        jnp.dot(w[2], h, preferred_element_type=jnp.float32) + b[:, 2:3], 0.0)

    # --- layer 4: out_dim == 1 -> VPU multiply + sublane reduce (lane-dense out) ---
    out = jnp.sum(w[3, :, 0:1] * h, axis=0, keepdims=True) + b[0:1, 3:4]  # (1, TB)
    o_ref[...] = out.astype(o_ref.dtype)


def pack_params(params):
    """Pack the 8 tiny parameter tensors into 2 arrays for the kernel."""
    w1, b1 = params["w1"], params["b1"]   # (1, H), (1, H)
    w2, b2 = params["w2"], params["b2"]   # (H, H), (1, H)
    w3, b3 = params["w3"], params["b3"]   # (H, H), (1, H)
    w4, b4 = params["w4"], params["b4"]   # (H, 1), (1, 1)
    H = w2.shape[0]
    assert w1.shape == (1, H) and w3.shape == (H, H) and w4.shape == (H, 1)

    w_stack = jnp.zeros((4, H, H), jnp.float32)
    w_stack = w_stack.at[0, :, 0].set(w1[0, :])   # layer1, (out, in=1) -> column 0
    w_stack = w_stack.at[1].set(w2.T)             # layer2, (out, in)
    w_stack = w_stack.at[2].set(w3.T)             # layer3, (out, in)
    w_stack = w_stack.at[3, :, 0].set(w4[:, 0])   # layer4, in-dim on sublanes

    b_stack = jnp.zeros((H, 4), jnp.float32)
    b_stack = b_stack.at[:, 0].set(b1[0, :])
    b_stack = b_stack.at[:, 1].set(b2[0, :])
    b_stack = b_stack.at[:, 2].set(b3[0, :])
    b_stack = b_stack.at[0, 3].set(b4[0, 0])
    return w_stack, b_stack


def simple_net_forward(x, params, *, tile=512):
    """x: (N, 1) float32 -> (N, 1) float32, SimpleNet forward with ReLU."""
    assert tile % 128 == 0
    N = x.shape[0]
    w_stack, b_stack = pack_params(params)

    # Lane-aligned batch tile (>=128, <=tile), pad the batch to a whole grid.
    TB = min(tile, max(128, pl.cdiv(N, 128) * 128))
    n_tiles = pl.cdiv(N, TB)
    N_pad = n_tiles * TB

    # Lane-major (1, N_pad) input row; padded tail is zeros (sliced off below).
    x_row = jnp.zeros((1, N_pad), jnp.float32).at[0, :N].set(x[:, 0])

    out_row = pl.pallas_call(
        _mlp_kernel,
        out_shape=jax.ShapeDtypeStruct((1, N_pad), jnp.float32),
        grid=(n_tiles,),
        in_specs=[
            pl.BlockSpec((1, TB), lambda i: (0, i)),            # batch slice
            pl.BlockSpec(w_stack.shape, lambda i: (0, 0, 0)),   # weights, resident
            pl.BlockSpec(b_stack.shape, lambda i: (0, 0)),      # biases, resident
        ],
        out_specs=pl.BlockSpec((1, TB), lambda i: (0, i)),
        compiler_params=pltpu.CompilerParams(
            dimension_semantics=("parallel",)),                 # 2 TCs on v7x
    )(x_row, w_stack, b_stack)

    return out_row[0, :N].reshape(N, 1)


def init_params(key, in_dim, h1, h2, h3, out_dim):
    """Deterministic init matching PyTorch nn.Linear's uniform(-1/sqrt(fan_in), ...)."""
    dims = [(in_dim, h1), (h1, h2), (h2, h3), (h3, out_dim)]
    params = {}
    for i, (fan_in, fan_out) in enumerate(dims, start=1):
        key, kw, kb = jax.random.split(key, 3)
        bound = 1.0 / jnp.sqrt(jnp.float32(fan_in))
        # stored as (in, out) so the math reference does x @ W
        params[f"w{i}"] = jax.random.uniform(
            kw, (fan_in, fan_out), jnp.float32, -bound, bound)
        params[f"b{i}"] = jax.random.uniform(
            kb, (1, fan_out), jnp.float32, -bound, bound)
    return params


def reference_forward(x, params):
    h = x
    for i in range(1, 4):
        h = jnp.maximum(h @ params[f"w{i}"] + params[f"b{i}"], 0.0)
    return h @ params["w4"] + params["b4"]


if __name__ == "__main__":
    # SimpleNet(in_dim=1, n_hidden_1=32, n_hidden_2=32, n_hidden_3=32, out_dim=1, ac='ReLU')
    in_dim, h1, h2, h3, out_dim = 1, 32, 32, 32, 1
    batch = 1000   # matches the module's data source: uniform(-10, 10, (1000, 1))

    key = jax.random.PRNGKey(0)
    key, kx = jax.random.split(key)
    x = jax.random.uniform(kx, (batch, in_dim), jnp.float32, -10.0, 10.0)
    params = init_params(key, in_dim, h1, h2, h3, out_dim)

    out = jax.block_until_ready(simple_net_forward(x, params))
    ref = reference_forward(x, params)

    assert out.shape == (batch, out_dim)
    assert jnp.allclose(out, ref, atol=1e-4, rtol=1e-4), float(jnp.max(jnp.abs(out - ref)))
    print("KERNEL_OK")
</pallas_src>

<mosaic_0001>
module attributes {stable_mosaic.version = 11 : i64} {
  func.func @_mlp_kernel(%arg0: i32, %arg1: memref<1x512xf32, #tpu.memory_space<vmem>>, %arg2: memref<4x32x32xf32, #tpu.memory_space<vmem>>, %arg3: memref<32x4xf32, #tpu.memory_space<vmem>>, %arg4: memref<1x512xf32, #tpu.memory_space<vmem>>) attributes {dimension_semantics = [#tpu.dimension_semantics<parallel>], iteration_bounds = array<i64: 2>, scalar_prefetch = 0 : i64, scratch_operands = 0 : i64, tpu.core_type = #tpu.core_type<tc>, window_params = [{transform_indices = @transform_0, window_bounds = array<i64: 1, 512>}, {pipeline_mode = #tpu.pipeline_mode<synchronous>, transform_indices = @transform_1, window_bounds = array<i64: 4, 32, 32>}, {pipeline_mode = #tpu.pipeline_mode<synchronous>, transform_indices = @transform_2, window_bounds = array<i64: 32, 4>}, {transform_indices = @transform_3, window_bounds = array<i64: 1, 512>}]} {
    %c0 = arith.constant 0 : index
    %c0_0 = arith.constant 0 : index
    %0 = vector.load %arg1[%c0, %c0_0] : memref<1x512xf32, #tpu.memory_space<vmem>>, vector<1x512xf32>
    %c0_1 = arith.constant 0 : index
    %c0_2 = arith.constant 0 : index
    %c0_3 = arith.constant 0 : index
    %1 = vector.load %arg2[%c0_1, %c0_2, %c0_3] : memref<4x32x32xf32, #tpu.memory_space<vmem>>, vector<4x32x32xf32>
    %c0_4 = arith.constant 0 : index
    %c0_5 = arith.constant 0 : index
    %2 = vector.load %arg3[%c0_4, %c0_5] : memref<32x4xf32, #tpu.memory_space<vmem>>, vector<32x4xf32>
    %3 = vector.extract_strided_slice %1 {offsets = [0, 0, 0], sizes = [1, 32, 1], strides = [1, 1, 1]} : vector<4x32x32xf32> to vector<1x32x1xf32>
    %4 = vector.shape_cast %3 : vector<1x32x1xf32> to vector<32x1xf32>
    %5 = vector.broadcast %4 : vector<32x1xf32> to vector<32x512xf32>
    %6 = vector.broadcast %0 : vector<1x512xf32> to vector<32x512xf32>
    %7 = arith.mulf %5, %6 : vector<32x512xf32>
    %8 = vector.extract_strided_slice %2 {offsets = [0, 0], sizes = [32, 1], strides = [1, 1]} : vector<32x4xf32> to vector<32x1xf32>
    %9 = vector.broadcast %8 : vector<32x1xf32> to vector<32x512xf32>
    %10 = arith.addf %7, %9 : vector<32x512xf32>
    %cst = arith.constant 0.000000e+00 : f32
    %11 = vector.broadcast %cst : f32 to vector<32x512xf32>
    %12 = arith.maximumf %10, %11 : vector<32x512xf32>
    %13 = vector.extract_strided_slice %1 {offsets = [1, 0, 0], sizes = [1, 32, 32], strides = [1, 1, 1]} : vector<4x32x32xf32> to vector<1x32x32xf32>
    %14 = vector.shape_cast %13 : vector<1x32x32xf32> to vector<32x32xf32>
    %cst_6 = arith.constant dense<0.000000e+00> : vector<32x512xf32>
    %15 = tpu.matmul %14, %12, %cst_6 {dimension_numbers = #tpu.dot_dimension_numbers<[1], [0], [0], [1], [0, 0, 1, 1], [], []>} : vector<32x32xf32>, vector<32x512xf32>, vector<32x512xf32> -> vector<32x512xf32>
    %16 = vector.extract_strided_slice %2 {offsets = [0, 1], sizes = [32, 1], strides = [1, 1]} : vector<32x4xf32> to vector<32x1xf32>
    %17 = vector.broadcast %16 : vector<32x1xf32> to vector<32x512xf32>
    %18 = arith.addf %15, %17 : vector<32x512xf32>
    %cst_7 = arith.constant 0.000000e+00 : f32
    %19 = vector.broadcast %cst_7 : f32 to vector<32x512xf32>
    %20 = arith.maximumf %18, %19 : vector<32x512xf32>
    %21 = vector.extract_strided_slice %1 {offsets = [2, 0, 0], sizes = [1, 32, 32], strides = [1, 1, 1]} : vector<4x32x32xf32> to vector<1x32x32xf32>
    %22 = vector.shape_cast %21 : vector<1x32x32xf32> to vector<32x32xf32>
    %cst_8 = arith.constant dense<0.000000e+00> : vector<32x512xf32>
    %23 = tpu.matmul %22, %20, %cst_8 {dimension_numbers = #tpu.dot_dimension_numbers<[1], [0], [0], [1], [0, 0, 1, 1], [], []>} : vector<32x32xf32>, vector<32x512xf32>, vector<32x512xf32> -> vector<32x512xf32>
    %24 = vector.extract_strided_slice %2 {offsets = [0, 2], sizes = [32, 1], strides = [1, 1]} : vector<32x4xf32> to vector<32x1xf32>
    %25 = vector.broadcast %24 : vector<32x1xf32> to vector<32x512xf32>
    %26 = arith.addf %23, %25 : vector<32x512xf32>
    %cst_9 = arith.constant 0.000000e+00 : f32
    %27 = vector.broadcast %cst_9 : f32 to vector<32x512xf32>
    %28 = arith.maximumf %26, %27 : vector<32x512xf32>
    %29 = vector.extract_strided_slice %1 {offsets = [3, 0, 0], sizes = [1, 32, 1], strides = [1, 1, 1]} : vector<4x32x32xf32> to vector<1x32x1xf32>
    %30 = vector.shape_cast %29 : vector<1x32x1xf32> to vector<32x1xf32>
    %31 = vector.broadcast %30 : vector<32x1xf32> to vector<32x512xf32>
    %32 = arith.mulf %31, %28 : vector<32x512xf32>
    %cst_10 = arith.constant dense<0.000000e+00> : vector<512xf32>
    %33 = vector.multi_reduction <add>, %32, %cst_10 [0] : vector<32x512xf32> to vector<512xf32>
    %34 = vector.shape_cast %33 : vector<512xf32> to vector<1x512xf32>
    %35 = vector.extract_strided_slice %2 {offsets = [0, 3], sizes = [1, 1], strides = [1, 1]} : vector<32x4xf32> to vector<1x1xf32>
    %36 = vector.broadcast %35 : vector<1x1xf32> to vector<1x512xf32>
    %37 = arith.addf %34, %36 : vector<1x512xf32>
    %c0_11 = arith.constant 0 : index
    %c0_12 = arith.constant 0 : index
    %38 = vector.load %arg4[%c0_11, %c0_12] : memref<1x512xf32, #tpu.memory_space<vmem>>, vector<1x512xf32>
    tpu.vector_store %arg4[%c0_11, %c0_12], %37 {strides = array<i32>} : memref<1x512xf32, #tpu.memory_space<vmem>>, vector<1x512xf32>,
    return
  }
  func.func @transform_0(%arg0: i32) -> (i32, i32) {
    %c0_i32 = arith.constant 0 : i32
    %c0_i32_0 = arith.constant 0 : i32
    return %c0_i32, %arg0 : i32, i32
  }
  func.func @transform_1(%arg0: i32) -> (i32, i32, i32) {
    %c0_i32 = arith.constant 0 : i32
    %c0_i32_0 = arith.constant 0 : i32
    %c0_i32_1 = arith.constant 0 : i32
    %c0_i32_2 = arith.constant 0 : i32
    return %c0_i32, %c0_i32_0, %c0_i32_1 : i32, i32, i32
  }
  func.func @transform_2(%arg0: i32) -> (i32, i32) {
    %c0_i32 = arith.constant 0 : i32
    %c0_i32_0 = arith.constant 0 : i32
    %c0_i32_1 = arith.constant 0 : i32
    return %c0_i32, %c0_i32_0 : i32, i32
  }
  func.func @transform_3(%arg0: i32) -> (i32, i32) {
    %c0_i32 = arith.constant 0 : i32
    %c0_i32_0 = arith.constant 0 : i32
    return %c0_i32, %arg0 : i32, i32
  }
}

</mosaic_0001>

<llo_original>
// kernel: tpu_custom_call.1
$region0: #{tpu_custom_call.1}
  #allocation0 [shape = 'u32[]', space=smem, size = 0x4, offset = 0x4, fixed_abs, tag = 'smem constant byte address 0x4 - core index']
  #allocation1 [shape = 'u32[144,128]{1,0:T(1,128)}', space=vmem, size = 0x12000, scoped, tag = 'internal scratch']
  %s0 = inlined_call_operand.vmem [shape: f32[1,1024], index: 0, kind: input, shape index: {}]
  %s1 = inlined_call_operand.hbm [shape: f32[4,32,32], index: 1, kind: input, shape index: {}]
  %s2 = inlined_call_operand.vmem [shape: f32[32,4], index: 2, kind: input, shape index: {}]
  %s3 = inlined_call_operand.hbm [shape: f32[1,1024], index: 3, kind: output, shape index: {}]
  %s4 = sld [smem:[#allocation0]]
  $region49: #{tpu_custom_call.1} parent=0
    _
  %s6 = ssub.s32 1, %s4
  %s7 = scalar_select 0, %s6, %s4
  $region1: #{tpu_custom_call.1} parent=0
    #allocation2 [shape = 'u8[65536]{0}', space=vmem, size = 0x10000, scoped, tag = 'input window, operand 1, single buffered']
    #allocation3 [shape = 's32[2]{0}', space=sflag, size = 0x8, scoped, tag = 'scoped memory for tpu_custom_call.1']
    #allocation4 [shape = 's32[2]{0}', space=sflag, size = 0x8, scoped, tag = 'scoped memory for tpu_custom_call.1']
    #allocation5 [shape = 'u8[4096]{0}', space=vmem, size = 0x1000, scoped, tag = 'output window, operand 0']
    %8 = vsyncpa [#allocation3], 0
    %9 = vsyncpa [#allocation4], 0
    %s10 = scalar_lea.sflag [#allocation4], 1
    %11 = vsyncpa %s10, 0
    loop: start=0, step=1, limit=4
    $region2: #{tpu_custom_call.1} parent=1 // loop_pre_header
      _
    $region3: #{tpu_custom_call.1} parent=1 // loop_header
      %s13 = sphi 0, %s17
      %p14 = scmp.ge.s32.totalorder %s13, 4
      %s23 = sphi 0, %s25
      %s26 = sphi 0, %s23
      %s27 = sphi 0, %s26
      %s43 = sphi 0, %s27
      %s47 = sphi 0, %s47
      %s49 = sphi 0, %s47
      %s50 = sphi 0, %s49
      %s64 = sphi 0, %s50
      %s68 = sphi 0, %s68
      %s70 = sphi 0, %s68
      %s71 = sphi 0, %s70
      %s85 = sphi 0, %s71
      %s91 = sphi 0, %s93
      %s94 = sphi 0, %s91
      %s95 = sphi 0, %s94
      %s111 = sphi 0, %s95
    $region4: #{tpu_custom_call.1} parent=1 // loop_header_branch
      %16 = sbr.rel (%p14) target = $region8
    $region5: #{tpu_custom_call.1} parent=1 // loop_body
      %s18 = ssub.s32 %s13, 1
      %s19 = ssub.s32 %s13, 2
      %s20 = sadd.s32 %s13, 1
      %s21 = ssub.s32 %s13, %s20
      %p22 = scmp.eq.s32.totalorder %s21, 0
      %s24 = sadd.s32 %s23, 1
      %s25 = scalar_select %p22, %s23, %s24
      %p28 = pneg %p22
      %p29 = scmp.eq.s32.totalorder %s13, 1
      %p30 = por %p28, %p29
      %p31 = scmp.ne.s32.totalorder %s23, %s26
      %p32 = scmp.eq.s32.totalorder %s13, 0
      %p33 = por %p31, %p32
      %p34 = scmp.ne.s32.totalorder %s23, %s26
      %p35 = scmp.eq.s32.totalorder %s18, 1
      %p36 = por %p34, %p35
      %p37 = scmp.ne.s32.totalorder %s26, %s27
      %p38 = scmp.eq.s32.totalorder %s18, 0
      %p39 = por %p37, %p38
      %p40 = scmp.ne.s32.totalorder %s26, %s27
      %p41 = scmp.eq.s32.totalorder %s19, 1
      %p42 = por %p40, %p41
      %p44 = scmp.ne.s32.totalorder %s27, %s43
      %p45 = scmp.eq.s32.totalorder %s19, 0
      %p46 = por %p44, %p45
      %s48 = sadd.s32 %s47, 1
      %p51 = scmp.eq.s32.totalorder %s13, 1
      %p52 = scmp.ne.s32.totalorder %s47, %s49
      %p53 = scmp.eq.s32.totalorder %s13, 0
      %p54 = por %p52, %p53
      %p55 = scmp.ne.s32.totalorder %s47, %s49
      %p56 = scmp.eq.s32.totalorder %s18, 1
      %p57 = por %p55, %p56
      %p58 = scmp.ne.s32.totalorder %s49, %s50
      %p59 = scmp.eq.s32.totalorder %s18, 0
      %p60 = por %p58, %p59
      %p61 = scmp.ne.s32.totalorder %s49, %s50
      %p62 = scmp.eq.s32.totalorder %s19, 1
      %p63 = por %p61, %p62
      %p65 = scmp.ne.s32.totalorder %s50, %s64
      %p66 = scmp.eq.s32.totalorder %s19, 0
      %p67 = por %p65, %p66
      %s69 = sadd.s32 %s68, 1
      %p72 = scmp.eq.s32.totalorder %s13, 1
      %p73 = scmp.ne.s32.totalorder %s68, %s70
      %p74 = scmp.eq.s32.totalorder %s13, 0
      %p75 = por %p73, %p74
      %p76 = scmp.ne.s32.totalorder %s68, %s70
      %p77 = scmp.eq.s32.totalorder %s18, 1
      %p78 = por %p76, %p77
      %p79 = scmp.ne.s32.totalorder %s70, %s71
      %p80 = scmp.eq.s32.totalorder %s18, 0
      %p81 = por %p79, %p80
      %p82 = scmp.ne.s32.totalorder %s70, %s71
      %p83 = scmp.eq.s32.totalorder %s19, 1
      %p84 = por %p82, %p83
      %p86 = scmp.ne.s32.totalorder %s71, %s85
      %p87 = scmp.eq.s32.totalorder %s19, 0
      %p88 = por %p86, %p87
      %s89 = ssub.s32 %s13, %s20
      %p90 = scmp.eq.s32.totalorder %s89, 0
      %s92 = sadd.s32 %s91, 1
      %s93 = scalar_select %p90, %s91, %s92
      %p96 = pneg %p90
      %p97 = scmp.eq.s32.totalorder %s13, 1
      %p98 = por %p96, %p97
      %p99 = scmp.ne.s32.totalorder %s91, %s94
      %p100 = scmp.eq.s32.totalorder %s13, 0
      %p101 = por %p99, %p100
      %p102 = scmp.ne.s32.totalorder %s91, %s94
      %p103 = scmp.eq.s32.totalorder %s18, 1
      %p104 = por %p102, %p103
      %p105 = scmp.ne.s32.totalorder %s94, %s95
      %p106 = scmp.eq.s32.totalorder %s18, 0
      %p107 = por %p105, %p106
      %p108 = scmp.ne.s32.totalorder %s94, %s95
      %p109 = scmp.eq.s32.totalorder %s19, 1
      %p110 = por %p108, %p109
      %p112 = scmp.ne.s32.totalorder %s95, %s111
      %p113 = scmp.eq.s32.totalorder %s19, 0
      %p114 = por %p112, %p113
      %p115 = scmp.le.s32.totalorder 1, %s13
      %p116 = scmp.lt.s32.totalorder %s13, 3
      %p117 = pnand %p115, %p116
      %p118 = pneg %p117
      // Predicated region
      $region9: #{tpu_custom_call.1} parent=5 // pred_check
        _
      $region10: #{tpu_custom_call.1} parent=5 // pred_check_branch
        %120 = sbr.rel (%p117) target = $region12
      $region11: #{tpu_custom_call.1} parent=5 // pred_region
        %s121 = ssub.s32 %s13, 1
        // Predicated region
        $region13: #{tpu_custom_call.1} parent=11 // pred_check
          %p122 = pneg %p60
        $region14: #{tpu_custom_call.1} parent=11 // pred_check_branch
          %124 = sbr.rel (%p122) target = $region16
        $region15: #{tpu_custom_call.1} parent=11 // pred_region
          %s126 = ssub.s32 2048, 2048
          %127 = vsyncadd [#allocation3], %s126
          %s128 = sshll.u32 [#allocation2], 4
          %s129 = int_to_ptr.vmem [resolvable:$true] %s128
          %134 = dma.hbm_to_vmem [thread:$0]  %s1, 2048, %s129, [#allocation3], 128, 128, 8
        $region16: #{tpu_custom_call.1} parent=11 // pred_fallthru
          _
        // Predicated region
        $region17: #{tpu_custom_call.1} parent=11 // pred_check
          %p135 = pneg %p81
        $region18: #{tpu_custom_call.1} parent=11 // pred_check_branch
          %137 = sbr.rel (%p135) target = $region20
        $region19: #{tpu_custom_call.1} parent=11 // pred_region
          _
        $region20: #{tpu_custom_call.1} parent=11 // pred_fallthru
          _
      $region12: #{tpu_custom_call.1} parent=5 // pred_fallthru
        _
      %p138 = scmp.lt.s32.totalorder %s13, 2
      // Predicated region
      $region21: #{tpu_custom_call.1} parent=5 // pred_check
        %p139 = pneg %p138
      $region22: #{tpu_custom_call.1} parent=5 // pred_check_branch
        %141 = sbr.rel (%p139) target = $region24
      $region23: #{tpu_custom_call.1} parent=5 // pred_region
        // Predicated region
        $region25: #{tpu_custom_call.1} parent=23 // pred_check
          %p142 = pneg %p33
        $region26: #{tpu_custom_call.1} parent=23 // pred_check_branch
          %144 = sbr.rel (%p142) target = $region28
        $region27: #{tpu_custom_call.1} parent=23 // pred_region
          %s145 = smul.u32 4, %s13
          %p146 = scmp.lt.s32.totalorder %s145, 7
          %s147 = scalar_select %p146, %s145, 7
          %s148 = scalar_lea.vmem %s0, %s147
          %s149 = smul.u32 4, %s13
        $region28: #{tpu_custom_call.1} parent=23 // pred_fallthru
          _
      $region24: #{tpu_custom_call.1} parent=5 // pred_fallthru
        _
      %p150 = scmp.le.s32.totalorder 1, %s13
      %p151 = scmp.lt.s32.totalorder %s13, 3
      %p152 = pnand %p150, %p151
      %p153 = pneg %p152
      // Predicated region
      $region29: #{tpu_custom_call.1} parent=5 // pred_check
        _
      $region30: #{tpu_custom_call.1} parent=5 // pred_check_branch
        %155 = sbr.rel (%p152) target = $region32
      $region31: #{tpu_custom_call.1} parent=5 // pred_region
        %s156 = ssub.s32 %s13, 1
        // Predicated region
        $region33: #{tpu_custom_call.1} parent=31 // pred_check
          %p157 = pneg %p60
        $region34: #{tpu_custom_call.1} parent=31 // pred_check_branch
          %159 = sbr.rel (%p157) target = $region36
        $region35: #{tpu_custom_call.1} parent=31 // pred_region
          %160 = dma.done [#allocation3], 2048
        $region36: #{tpu_custom_call.1} parent=31 // pred_fallthru
          _
        %s161 = smul.u32 4, %s18
        %p162 = scmp.lt.s32.totalorder %s161, 7
        %s163 = scalar_select %p162, %s161, 7
        %s164 = scalar_lea.vmem %s0, %s163
        %p165 = pneg %p39
        %p166 = pneg %p36
        %p167 = pneg %p60
        %p168 = pneg %p57
        %p169 = pneg %p81
        %p170 = pneg %p78
        %p171 = pneg %p107
        %p172 = pneg %p104
        %s173 = sand.u32 %s94, 1
        %s174 = scalar_lea.sflag [#allocation4], %s173
        %s175 = sand.u32 %s94, 1
        %s176 = smul.addr %s175, 4
        %s177 = scalar_lea.vmem [#allocation5], %s176
        %s178 = smul.u32 4, %s18
        %p179 = scmp.lt.s32.totalorder %s178, 7
        %s180 = scalar_select %p179, %s178, 7
        %s181 = scalar_lea.vmem %s0, %s180
        %s182 = smul.u32 4, %s18
        %s183 = smul.u32 4, %s18
        %v184 = vld [vmem:[%s181] sm:$0xf]
        %v185 = vld [vmem:[#allocation2] sm:$0xff]
        %v186 = vld [vmem:[#allocation2 + $0x8] sm:$0xff]
        %v187 = vld [vmem:[#allocation2 + $0x10] sm:$0xff]
        %v188 = vld [vmem:[#allocation2 + $0x18] sm:$0xff]
        %v189 = vld [vmem:[#allocation2 + $0x20] sm:$0xff]
        %v190 = vld [vmem:[#allocation2 + $0x28] sm:$0xff]
        %v191 = vld [vmem:[#allocation2 + $0x30] sm:$0xff]
        %v192 = vld [vmem:[#allocation2 + $0x38] sm:$0xff]
        %v193 = vld [vmem:[#allocation2 + $0x40] sm:$0xff]
        %v194 = vld [vmem:[#allocation2 + $0x48] sm:$0xff]
        %v195 = vld [vmem:[#allocation2 + $0x50] sm:$0xff]
        %v196 = vld [vmem:[#allocation2 + $0x58] sm:$0xff]
        %v197 = vld [vmem:[#allocation2 + $0x60] sm:$0xff]
        %v198 = vld [vmem:[#allocation2 + $0x68] sm:$0xff]
        %v199 = vld [vmem:[#allocation2 + $0x70] sm:$0xff]
        %v200 = vld [vmem:[#allocation2 + $0x78] sm:$0xff]
        %v201 = vld [vmem:[%s2] sm:$0xff]
        %v202 = vld [vmem:[%s2 + $0x8] sm:$0xff]
        %v203 = vld [vmem:[%s2 + $0x10] sm:$0xff]
        %v204 = vld [vmem:[%s2 + $0x18] sm:$0xff]
        %206 = vset.pattern.permute.xlu0 0
        %207 = vperm.xlu0 %206, %v185
        %v208 = vpop.permute.xlu0 %207
        %211 = vset.pattern.permute.xlu0 0
        %212 = vperm.xlu0 %211, %v186
        %v213 = vpop.permute.xlu0 %212
        %216 = vset.pattern.permute.xlu0 0
        %217 = vperm.xlu0 %216, %v187
        %v218 = vpop.permute.xlu0 %217
        %221 = vset.pattern.permute.xlu0 0
        %222 = vperm.xlu0 %221, %v188
        %v223 = vpop.permute.xlu0 %222
        %v226 = vlaneseq
        %v227 = vshrl.u32 %v226, 7
        %v228 = vsub.s32 0, %v227
        %v229 = vrot.slane %v184, %v228
        %v230 = vlaneseq
        %v231 = vshrl.u32 %v230, 7
        %v232 = vsub.s32 1, %v231
        %v233 = vrot.slane %v184, %v232
        %v234 = vlaneseq
        %v235 = vshrl.u32 %v234, 7
        %v236 = vsub.s32 2, %v235
        %v237 = vrot.slane %v184, %v236
        %v238 = vlaneseq
        %v239 = vshrl.u32 %v238, 7
        %v240 = vsub.s32 3, %v239
        %v241 = vrot.slane %v184, %v240
        %v246 = vmul.f32 %v208, %v229
        %v247 = vmul.f32 %v208, %v233
        %v248 = vmul.f32 %v208, %v237
        %v249 = vmul.f32 %v208, %v241
        %v250 = vmul.f32 %v213, %v229
        %v251 = vmul.f32 %v213, %v233
        %v252 = vmul.f32 %v213, %v237
        %v253 = vmul.f32 %v213, %v241
        %v254 = vmul.f32 %v218, %v229
        %v255 = vmul.f32 %v218, %v233
        %v256 = vmul.f32 %v218, %v237
        %v257 = vmul.f32 %v218, %v241
        %v258 = vmul.f32 %v223, %v229
        %v259 = vmul.f32 %v223, %v233
        %v260 = vmul.f32 %v223, %v237
        %v261 = vmul.f32 %v223, %v241
        %263 = vset.pattern.permute.xlu0 0
        %264 = vperm.xlu0 %263, %v201
        %v265 = vpop.permute.xlu0 %264
        %268 = vset.pattern.permute.xlu0 0
        %269 = vperm.xlu0 %268, %v202
        %v270 = vpop.permute.xlu0 %269
        %273 = vset.pattern.permute.xlu0 0
        %274 = vperm.xlu0 %273, %v203
        %v275 = vpop.permute.xlu0 %274
        %278 = vset.pattern.permute.xlu0 0
        %279 = vperm.xlu0 %278, %v204
        %v280 = vpop.permute.xlu0 %279
        %v282 = vadd.f32 %v246, %v265
        %v283 = vadd.f32 %v247, %v265
        %v284 = vadd.f32 %v248, %v265
        %v285 = vadd.f32 %v249, %v265
        %v286 = vadd.f32 %v250, %v270
        %v287 = vadd.f32 %v251, %v270
        %v288 = vadd.f32 %v252, %v270
        %v289 = vadd.f32 %v253, %v270
        %v290 = vadd.f32 %v254, %v275
        %v291 = vadd.f32 %v255, %v275
        %v292 = vadd.f32 %v256, %v275
        %v293 = vadd.f32 %v257, %v275
        %v294 = vadd.f32 %v258, %v280
        %v295 = vadd.f32 %v259, %v280
        %v296 = vadd.f32 %v260, %v280
        %v297 = vadd.f32 %v261, %v280
        %v298 = vmax.f32 %v282, 0.0
        %v299 = vmax.f32 %v283, 0.0
        %v300 = vmax.f32 %v284, 0.0
        %v301 = vmax.f32 %v285, 0.0
        %v302 = vmax.f32 %v286, 0.0
        %v303 = vmax.f32 %v287, 0.0
        %v304 = vmax.f32 %v288, 0.0
        %v305 = vmax.f32 %v289, 0.0
        %v306 = vmax.f32 %v290, 0.0
        %v307 = vmax.f32 %v291, 0.0
        %v308 = vmax.f32 %v292, 0.0
        %v309 = vmax.f32 %v293, 0.0
        %v310 = vmax.f32 %v294, 0.0
        %v311 = vmax.f32 %v295, 0.0
        %v312 = vmax.f32 %v296, 0.0
        %v313 = vmax.f32 %v297, 0.0
        %314 = vset.pattern.permute.xlu0 1
        %315 = vperm.xlu0 %314, %v201
        %v316 = vpop.permute.xlu0 %315
        %318 = vset.pattern.permute.xlu0 1
        %319 = vperm.xlu0 %318, %v202
        %v320 = vpop.permute.xlu0 %319
        %322 = vset.pattern.permute.xlu0 1
        %323 = vperm.xlu0 %322, %v203
        %v324 = vpop.permute.xlu0 %323
        %326 = vset.pattern.permute.xlu0 1
        %327 = vperm.xlu0 %326, %v204
        %v328 = vpop.permute.xlu0 %327
        %vm330 = vcmask 261120
        %v332 = vsel %vm330, %v189, 0
        %v335 = vsel %vm330, %v190, 0
        %v338 = vsel %vm330, %v191, 0
        %v341 = vsel %vm330, %v192, 0
        %343 = vmatprep.subr.mxu0 %v299
        %344 = vmatpush1.msra.mxu0 %v298
        %345 = vmatprep.subr.mxu0 %v303
        %346 = vmatpush1.msra.mxu0 %v302
        %347 = vmatprep.subr.mxu0 %v307
        %348 = vmatpush1.msra.mxu0 %v306
        %349 = vmatprep.subr.mxu0 %v311
        %350 = vmatpush1.msra.mxu0 %v310
        %351 = vmatprep.subr.mxu0 0.0
        %352 = vmatpush1.msra.mxu0 0.0
        %353 = vmatprep.subr.mxu0 0.0
        %354 = vmatpush1.msra.mxu0 0.0
        %355 = vmatprep.subr.mxu0 0.0
        %356 = vmatpush1.msra.mxu0 0.0
        %357 = vmatprep.subr.mxu0 0.0
        %358 = vmatpush1.msra.mxu0 0.0
        %359 = vmatprep.subr.mxu0 0.0
        %360 = vmatpush1.msra.mxu0 0.0
        %361 = vmatprep.subr.mxu0 0.0
        %362 = vmatpush1.msra.mxu0 0.0
        %363 = vmatprep.subr.mxu0 0.0
        %364 = vmatpush1.msra.mxu0 0.0
        %365 = vmatprep.subr.mxu0 0.0
        %366 = vmatpush1.msra.mxu0 0.0
        %367 = vmatprep.subr.mxu0 0.0
        %368 = vmatpush1.msra.mxu0 0.0
        %369 = vmatprep.subr.mxu0 0.0
        %370 = vmatpush1.msra.mxu0 0.0
        %371 = vmatprep.subr.mxu0 0.0
        %372 = vmatpush1.msra.mxu0 0.0
        %373 = vmatprep.subr.mxu0 0.0
        %374 = vmatpush1.msra.mxu0 0.0
        %375 = vmatprep.subr.mxu0 0.0
        %376 = vmatpush1.msra.mxu0 0.0
        %377 = vmatprep.subr.mxu0 0.0
        %378 = vmatpush1.msra.mxu0 0.0
        %379 = vmatprep.subr.mxu0 0.0
        %380 = vmatpush1.msra.mxu0 0.0
        %381 = vmatprep.subr.mxu0 0.0
        %382 = vmatpush1.msra.mxu0 0.0
        %383 = vmatprep.subr.mxu0 0.0
        %384 = vmatpush1.msra.mxu0 0.0
        %385 = vmatprep.subr.mxu0 0.0
        %386 = vmatpush1.msra.mxu0 0.0
        %387 = vmatprep.subr.mxu0 0.0
        %388 = vmatpush1.msra.mxu0 0.0
        %389 = vmatprep.subr.mxu0 0.0
        %390 = vmatpush1.msra.mxu0 0.0
        %391 = vmatprep.subr.mxu0 0.0
        %392 = vmatpush1.msra.mxu0 0.0
        %393 = vmatprep.subr.mxu0 0.0
        %394 = vmatpush1.msra.mxu0 0.0
        %395 = vmatprep.subr.mxu0 0.0
        %396 = vmatpush1.msra.mxu0 0.0
        %397 = vmatprep.subr.mxu0 0.0
        %398 = vmatpush1.msra.mxu0 0.0
        %399 = vmatprep.subr.mxu0 0.0
        %400 = vmatpush1.msra.mxu0 0.0
        %401 = vmatprep.subr.mxu0 0.0
        %402 = vmatpush1.msra.mxu0 0.0
        %403 = vmatprep.subr.mxu0 0.0
        %404 = vmatpush1.msra.mxu0 0.0
        %405 = vmatprep.subr.mxu0 0.0
        %406 = vmatpush1.msra.mxu0 0.0
        %407 = vmatprep.mubr.f32.mxu0 0.0
        %408 = vmatmul.mubr.f32.gmra.mrb[0].mxu0 %v332
        %v409 = vpop.f32.mrb[0].mxu0
        %v410 = vadd.f32 %v316, %v409
        %v411 = vpop.f32.mrb[0].mxu0
        %v412 = vadd.f32 %v316, %v411
        %413 = vmatprep.mubr.f32.mxu0 0.0
        %414 = vmatmul.mubr.f32.gmra.mrb[0].mxu0 %v335
        %v415 = vpop.f32.mrb[0].mxu0
        %v416 = vadd.f32 %v320, %v415
        %v417 = vpop.f32.mrb[0].mxu0
        %v418 = vadd.f32 %v320, %v417
        %419 = vmatprep.mubr.f32.mxu0 0.0
        %420 = vmatmul.mubr.f32.gmra.mrb[0].mxu0 %v338
        %v421 = vpop.f32.mrb[0].mxu0
        %v422 = vadd.f32 %v324, %v421
        %v423 = vpop.f32.mrb[0].mxu0
        %v424 = vadd.f32 %v324, %v423
        %425 = vmatprep.mubr.f32.mxu0 0.0
        %426 = vmatmul.mubr.f32.gmra.mrb[0].mxu0 %v341
        %v427 = vpop.f32.mrb[0].mxu0
        %v428 = vadd.f32 %v328, %v427
        %v429 = vpop.f32.mrb[0].mxu0
        %v430 = vadd.f32 %v328, %v429
        %431 = vdwg.mxu0
        %432 = vmatprep.subr.mxu0 %v301
        %433 = vmatpush1.msra.mxu0 %v300
        %434 = vmatprep.subr.mxu0 %v305
        %435 = vmatpush1.msra.mxu0 %v304
        %436 = vmatprep.subr.mxu0 %v309
        %437 = vmatpush1.msra.mxu0 %v308
        %438 = vmatprep.subr.mxu0 %v313
        %439 = vmatpush1.msra.mxu0 %v312
        %440 = vmatprep.subr.mxu0 0.0
        %441 = vmatpush1.msra.mxu0 0.0
        %442 = vmatprep.subr.mxu0 0.0
        %443 = vmatpush1.msra.mxu0 0.0
        %444 = vmatprep.subr.mxu0 0.0
        %445 = vmatpush1.msra.mxu0 0.0
        %446 = vmatprep.subr.mxu0 0.0
        %447 = vmatpush1.msra.mxu0 0.0
        %448 = vmatprep.subr.mxu0 0.0
        %449 = vmatpush1.msra.mxu0 0.0
        %450 = vmatprep.subr.mxu0 0.0
        %451 = vmatpush1.msra.mxu0 0.0
        %452 = vmatprep.subr.mxu0 0.0
        %453 = vmatpush1.msra.mxu0 0.0
        %454 = vmatprep.subr.mxu0 0.0
        %455 = vmatpush1.msra.mxu0 0.0
        %456 = vmatprep.subr.mxu0 0.0
        %457 = vmatpush1.msra.mxu0 0.0
        %458 = vmatprep.subr.mxu0 0.0
        %459 = vmatpush1.msra.mxu0 0.0
        %460 = vmatprep.subr.mxu0 0.0
        %461 = vmatpush1.msra.mxu0 0.0
        %462 = vmatprep.subr.mxu0 0.0
        %463 = vmatpush1.msra.mxu0 0.0
        %464 = vmatprep.subr.mxu0 0.0
        %465 = vmatpush1.msra.mxu0 0.0
        %466 = vmatprep.subr.mxu0 0.0
        %467 = vmatpush1.msra.mxu0 0.0
        %468 = vmatprep.subr.mxu0 0.0
        %469 = vmatpush1.msra.mxu0 0.0
        %470 = vmatprep.subr.mxu0 0.0
        %471 = vmatpush1.msra.mxu0 0.0
        %472 = vmatprep.subr.mxu0 0.0
        %473 = vmatpush1.msra.mxu0 0.0
        %474 = vmatprep.subr.mxu0 0.0
        %475 = vmatpush1.msra.mxu0 0.0
        %476 = vmatprep.subr.mxu0 0.0
        %477 = vmatpush1.msra.mxu0 0.0
        %478 = vmatprep.subr.mxu0 0.0
        %479 = vmatpush1.msra.mxu0 0.0
        %480 = vmatprep.subr.mxu0 0.0
        %481 = vmatpush1.msra.mxu0 0.0
        %482 = vmatprep.subr.mxu0 0.0
        %483 = vmatpush1.msra.mxu0 0.0
        %484 = vmatprep.subr.mxu0 0.0
        %485 = vmatpush1.msra.mxu0 0.0
        %486 = vmatprep.subr.mxu0 0.0
        %487 = vmatpush1.msra.mxu0 0.0
        %488 = vmatprep.subr.mxu0 0.0
        %489 = vmatpush1.msra.mxu0 0.0
        %490 = vmatprep.subr.mxu0 0.0
        %491 = vmatpush1.msra.mxu0 0.0
        %492 = vmatprep.subr.mxu0 0.0
        %493 = vmatpush1.msra.mxu0 0.0
        %494 = vmatprep.subr.mxu0 0.0
        %495 = vmatpush1.msra.mxu0 0.0
        %496 = vmatprep.mubr.f32.mxu0 0.0
        %497 = vmatmul.mubr.f32.gmra.mrb[0].mxu0 %v332
        %v498 = vpop.f32.mrb[0].mxu0
        %v499 = vadd.f32 %v316, %v498
        %v500 = vpop.f32.mrb[0].mxu0
        %v501 = vadd.f32 %v316, %v500
        %502 = vmatprep.mubr.f32.mxu0 0.0
        %503 = vmatmul.mubr.f32.gmra.mrb[0].mxu0 %v335
        %v504 = vpop.f32.mrb[0].mxu0
        %v505 = vadd.f32 %v320, %v504
        %v506 = vpop.f32.mrb[0].mxu0
        %v507 = vadd.f32 %v320, %v506
        %508 = vmatprep.mubr.f32.mxu0 0.0
        %509 = vmatmul.mubr.f32.gmra.mrb[0].mxu0 %v338
        %v510 = vpop.f32.mrb[0].mxu0
        %v511 = vadd.f32 %v324, %v510
        %v512 = vpop.f32.mrb[0].mxu0
        %v513 = vadd.f32 %v324, %v512
        %514 = vmatprep.mubr.f32.mxu0 0.0
        %515 = vmatmul.mubr.f32.gmra.mrb[0].mxu0 %v341
        %v516 = vpop.f32.mrb[0].mxu0
        %v517 = vadd.f32 %v328, %v516
        %v518 = vpop.f32.mrb[0].mxu0
        %v519 = vadd.f32 %v328, %v518
        %520 = vdwg.mxu0
        %v521 = vmax.f32 %v410, 0.0
        %v522 = vmax.f32 %v412, 0.0
        %v523 = vmax.f32 %v499, 0.0
        %v524 = vmax.f32 %v501, 0.0
        %v525 = vmax.f32 %v416, 0.0
        %v526 = vmax.f32 %v418, 0.0
        %v527 = vmax.f32 %v505, 0.0
        %v528 = vmax.f32 %v507, 0.0
        %v529 = vmax.f32 %v422, 0.0
        %v530 = vmax.f32 %v424, 0.0
        %v531 = vmax.f32 %v511, 0.0
        %v532 = vmax.f32 %v513, 0.0
        %v533 = vmax.f32 %v428, 0.0
        %v534 = vmax.f32 %v430, 0.0
        %v535 = vmax.f32 %v517, 0.0
        %v536 = vmax.f32 %v519, 0.0
        %537 = vset.pattern.permute.xlu0 2
        %538 = vperm.xlu0 %537, %v201
        %v539 = vpop.permute.xlu0 %538
        %541 = vset.pattern.permute.xlu0 2
        %542 = vperm.xlu0 %541, %v202
        %v543 = vpop.permute.xlu0 %542
        %545 = vset.pattern.permute.xlu0 2
        %546 = vperm.xlu0 %545, %v203
        %v547 = vpop.permute.xlu0 %546
        %549 = vset.pattern.permute.xlu0 2
        %550 = vperm.xlu0 %549, %v204
        %v551 = vpop.permute.xlu0 %550
        %v554 = vsel %vm330, %v193, 0
        %v557 = vsel %vm330, %v194, 0
        %v560 = vsel %vm330, %v195, 0
        %v563 = vsel %vm330, %v196, 0
        %565 = vmatprep.subr.mxu0 %v522
        %566 = vmatpush1.msra.mxu0 %v521
        %567 = vmatprep.subr.mxu0 %v526
        %568 = vmatpush1.msra.mxu0 %v525
        %569 = vmatprep.subr.mxu0 %v530
        %570 = vmatpush1.msra.mxu0 %v529
        %571 = vmatprep.subr.mxu0 %v534
        %572 = vmatpush1.msra.mxu0 %v533
        %573 = vmatprep.subr.mxu0 0.0
        %574 = vmatpush1.msra.mxu0 0.0
        %575 = vmatprep.subr.mxu0 0.0
        %576 = vmatpush1.msra.mxu0 0.0
        %577 = vmatprep.subr.mxu0 0.0
        %578 = vmatpush1.msra.mxu0 0.0
        %579 = vmatprep.subr.mxu0 0.0
        %580 = vmatpush1.msra.mxu0 0.0
        %581 = vmatprep.subr.mxu0 0.0
        %582 = vmatpush1.msra.mxu0 0.0
        %583 = vmatprep.subr.mxu0 0.0
        %584 = vmatpush1.msra.mxu0 0.0
        %585 = vmatprep.subr.mxu0 0.0
        %586 = vmatpush1.msra.mxu0 0.0
        %587 = vmatprep.subr.mxu0 0.0
        %588 = vmatpush1.msra.mxu0 0.0
        %589 = vmatprep.subr.mxu0 0.0
        %590 = vmatpush1.msra.mxu0 0.0
        %591 = vmatprep.subr.mxu0 0.0
        %592 = vmatpush1.msra.mxu0 0.0
        %593 = vmatprep.subr.mxu0 0.0
        %594 = vmatpush1.msra.mxu0 0.0
        %595 = vmatprep.subr.mxu0 0.0
        %596 = vmatpush1.msra.mxu0 0.0
        %597 = vmatprep.subr.mxu0 0.0
        %598 = vmatpush1.msra.mxu0 0.0
        %599 = vmatprep.subr.mxu0 0.0
        %600 = vmatpush1.msra.mxu0 0.0
        %601 = vmatprep.subr.mxu0 0.0
        %602 = vmatpush1.msra.mxu0 0.0
        %603 = vmatprep.subr.mxu0 0.0
        %604 = vmatpush1.msra.mxu0 0.0
        %605 = vmatprep.subr.mxu0 0.0
        %606 = vmatpush1.msra.mxu0 0.0
        %607 = vmatprep.subr.mxu0 0.0
        %608 = vmatpush1.msra.mxu0 0.0
        %609 = vmatprep.subr.mxu0 0.0
        %610 = vmatpush1.msra.mxu0 0.0
        %611 = vmatprep.subr.mxu0 0.0
        %612 = vmatpush1.msra.mxu0 0.0
        %613 = vmatprep.subr.mxu0 0.0
        %614 = vmatpush1.msra.mxu0 0.0
        %615 = vmatprep.subr.mxu0 0.0
        %616 = vmatpush1.msra.mxu0 0.0
        %617 = vmatprep.subr.mxu0 0.0
        %618 = vmatpush1.msra.mxu0 0.0
        %619 = vmatprep.subr.mxu0 0.0
        %620 = vmatpush1.msra.mxu0 0.0
        %621 = vmatprep.subr.mxu0 0.0
        %622 = vmatpush1.msra.mxu0 0.0
        %623 = vmatprep.subr.mxu0 0.0
        %624 = vmatpush1.msra.mxu0 0.0
        %625 = vmatprep.subr.mxu0 0.0
        %626 = vmatpush1.msra.mxu0 0.0
        %627 = vmatprep.subr.mxu0 0.0
        %628 = vmatpush1.msra.mxu0 0.0
        %629 = vmatprep.mubr.f32.mxu0 0.0
        %630 = vmatmul.mubr.f32.gmra.mrb[0].mxu0 %v554
        %v631 = vpop.f32.mrb[0].mxu0
        %v632 = vadd.f32 %v539, %v631
        %v633 = vpop.f32.mrb[0].mxu0
        %v634 = vadd.f32 %v539, %v633
        %635 = vmatprep.mubr.f32.mxu0 0.0
        %636 = vmatmul.mubr.f32.gmra.mrb[0].mxu0 %v557
        %v637 = vpop.f32.mrb[0].mxu0
        %v638 = vadd.f32 %v543, %v637
        %v639 = vpop.f32.mrb[0].mxu0
        %v640 = vadd.f32 %v543, %v639
        %641 = vmatprep.mubr.f32.mxu0 0.0
        %642 = vmatmul.mubr.f32.gmra.mrb[0].mxu0 %v560
        %v643 = vpop.f32.mrb[0].mxu0
        %v644 = vadd.f32 %v547, %v643
        %v645 = vpop.f32.mrb[0].mxu0
        %v646 = vadd.f32 %v547, %v645
        %647 = vmatprep.mubr.f32.mxu0 0.0
        %648 = vmatmul.mubr.f32.gmra.mrb[0].mxu0 %v563
        %v649 = vpop.f32.mrb[0].mxu0
        %v650 = vadd.f32 %v551, %v649
        %v651 = vpop.f32.mrb[0].mxu0
        %v652 = vadd.f32 %v551, %v651
        %653 = vdwg.mxu0
        %654 = vmatprep.subr.mxu0 %v524
        %655 = vmatpush1.msra.mxu0 %v523
        %656 = vmatprep.subr.mxu0 %v528
        %657 = vmatpush1.msra.mxu0 %v527
        %658 = vmatprep.subr.mxu0 %v532
        %659 = vmatpush1.msra.mxu0 %v531
        %660 = vmatprep.subr.mxu0 %v536
        %661 = vmatpush1.msra.mxu0 %v535
        %662 = vmatprep.subr.mxu0 0.0
        %663 = vmatpush1.msra.mxu0 0.0
        %664 = vmatprep.subr.mxu0 0.0
        %665 = vmatpush1.msra.mxu0 0.0
        %666 = vmatprep.subr.mxu0 0.0
        %667 = vmatpush1.msra.mxu0 0.0
        %668 = vmatprep.subr.mxu0 0.0
        %669 = vmatpush1.msra.mxu0 0.0
        %670 = vmatprep.subr.mxu0 0.0
        %671 = vmatpush1.msra.mxu0 0.0
        %672 = vmatprep.subr.mxu0 0.0
        %673 = vmatpush1.msra.mxu0 0.0
        %674 = vmatprep.subr.mxu0 0.0
        %675 = vmatpush1.msra.mxu0 0.0
        %676 = vmatprep.subr.mxu0 0.0
        %677 = vmatpush1.msra.mxu0 0.0
        %678 = vmatprep.subr.mxu0 0.0
        %679 = vmatpush1.msra.mxu0 0.0
        %680 = vmatprep.subr.mxu0 0.0
        %681 = vmatpush1.msra.mxu0 0.0
        %682 = vmatprep.subr.mxu0 0.0
        %683 = vmatpush1.msra.mxu0 0.0
        %684 = vmatprep.subr.mxu0 0.0
        %685 = vmatpush1.msra.mxu0 0.0
        %686 = vmatprep.subr.mxu0 0.0
        %687 = vmatpush1.msra.mxu0 0.0
        %688 = vmatprep.subr.mxu0 0.0
        %689 = vmatpush1.msra.mxu0 0.0
        %690 = vmatprep.subr.mxu0 0.0
        %691 = vmatpush1.msra.mxu0 0.0
        %692 = vmatprep.subr.mxu0 0.0
        %693 = vmatpush1.msra.mxu0 0.0
        %694 = vmatprep.subr.mxu0 0.0
        %695 = vmatpush1.msra.mxu0 0.0
        %696 = vmatprep.subr.mxu0 0.0
        %697 = vmatpush1.msra.mxu0 0.0
        %698 = vmatprep.subr.mxu0 0.0
        %699 = vmatpush1.msra.mxu0 0.0
        %700 = vmatprep.subr.mxu0 0.0
        %701 = vmatpush1.msra.mxu0 0.0
        %702 = vmatprep.subr.mxu0 0.0
        %703 = vmatpush1.msra.mxu0 0.0
        %704 = vmatprep.subr.mxu0 0.0
        %705 = vmatpush1.msra.mxu0 0.0
        %706 = vmatprep.subr.mxu0 0.0
        %707 = vmatpush1.msra.mxu0 0.0
        %708 = vmatprep.subr.mxu0 0.0
        %709 = vmatpush1.msra.mxu0 0.0
        %710 = vmatprep.subr.mxu0 0.0
        %711 = vmatpush1.msra.mxu0 0.0
        %712 = vmatprep.subr.mxu0 0.0
        %713 = vmatpush1.msra.mxu0 0.0
        %714 = vmatprep.subr.mxu0 0.0
        %715 = vmatpush1.msra.mxu0 0.0
        %716 = vmatprep.subr.mxu0 0.0
        %717 = vmatpush1.msra.mxu0 0.0
        %718 = vmatprep.mubr.f32.mxu0 0.0
        %719 = vmatmul.mubr.f32.gmra.mrb[0].mxu0 %v554
        %v720 = vpop.f32.mrb[0].mxu0
        %v721 = vadd.f32 %v539, %v720
        %v722 = vpop.f32.mrb[0].mxu0
        %v723 = vadd.f32 %v539, %v722
        %724 = vmatprep.mubr.f32.mxu0 0.0
        %725 = vmatmul.mubr.f32.gmra.mrb[0].mxu0 %v557
        %v726 = vpop.f32.mrb[0].mxu0
        %v727 = vadd.f32 %v543, %v726
        %v728 = vpop.f32.mrb[0].mxu0
        %v729 = vadd.f32 %v543, %v728
        %730 = vmatprep.mubr.f32.mxu0 0.0
        %731 = vmatmul.mubr.f32.gmra.mrb[0].mxu0 %v560
        %v732 = vpop.f32.mrb[0].mxu0
        %v733 = vadd.f32 %v547, %v732
        %v734 = vpop.f32.mrb[0].mxu0
        %v735 = vadd.f32 %v547, %v734
        %736 = vmatprep.mubr.f32.mxu0 0.0
        %737 = vmatmul.mubr.f32.gmra.mrb[0].mxu0 %v563
        %v738 = vpop.f32.mrb[0].mxu0
        %v739 = vadd.f32 %v551, %v738
        %v740 = vpop.f32.mrb[0].mxu0
        %v741 = vadd.f32 %v551, %v740
        %742 = vdwg.mxu0
        %v743 = vmax.f32 %v632, 0.0
        %v744 = vmax.f32 %v634, 0.0
        %v745 = vmax.f32 %v721, 0.0
        %v746 = vmax.f32 %v723, 0.0
        %v747 = vmax.f32 %v638, 0.0
        %v748 = vmax.f32 %v640, 0.0
        %v749 = vmax.f32 %v727, 0.0
        %v750 = vmax.f32 %v729, 0.0
        %v751 = vmax.f32 %v644, 0.0
        %v752 = vmax.f32 %v646, 0.0
        %v753 = vmax.f32 %v733, 0.0
        %v754 = vmax.f32 %v735, 0.0
        %v755 = vmax.f32 %v650, 0.0
        %v756 = vmax.f32 %v652, 0.0
        %v757 = vmax.f32 %v739, 0.0
        %v758 = vmax.f32 %v741, 0.0
        %760 = vset.pattern.permute.xlu0 0
        %761 = vperm.xlu0 %760, %v197
        %v762 = vpop.permute.xlu0 %761
        %765 = vset.pattern.permute.xlu0 0
        %766 = vperm.xlu0 %765, %v198
        %v767 = vpop.permute.xlu0 %766
        %770 = vset.pattern.permute.xlu0 0
        %771 = vperm.xlu0 %770, %v199
        %v772 = vpop.permute.xlu0 %771
        %775 = vset.pattern.permute.xlu0 0
        %776 = vperm.xlu0 %775, %v200
        %v777 = vpop.permute.xlu0 %776
        %v779 = vmul.f32 %v762, %v743
        %v780 = vmul.f32 %v762, %v744
        %v781 = vmul.f32 %v762, %v745
        %v782 = vmul.f32 %v762, %v746
        %v783 = vmul.f32 %v767, %v747
        %v784 = vmul.f32 %v767, %v748
        %v785 = vmul.f32 %v767, %v749
        %v786 = vmul.f32 %v767, %v750
        %v787 = vmul.f32 %v772, %v751
        %v788 = vmul.f32 %v772, %v752
        %v789 = vmul.f32 %v772, %v753
        %v790 = vmul.f32 %v772, %v754
        %v791 = vmul.f32 %v777, %v755
        %v792 = vmul.f32 %v777, %v756
        %v793 = vmul.f32 %v777, %v757
        %v794 = vmul.f32 %v777, %v758
        %v795 = vadd.f32 %v779, %v783
        %v796 = vadd.f32 %v795, %v787
        %v797 = vadd.f32 %v796, %v791
        %v798 = vrot.slane %v797, 4
        %v799 = vadd.f32 %v797, %v798
        %v800 = vrot.slane %v799, 2
        %v801 = vadd.f32 %v799, %v800
        %v802 = vrot.slane %v801, 1
        %v803 = vadd.f32 %v801, %v802
        %v804 = vadd.f32 %v780, %v784
        %v805 = vadd.f32 %v804, %v788
        %v806 = vadd.f32 %v805, %v792
        %v807 = vrot.slane %v806, 4
        %v808 = vadd.f32 %v806, %v807
        %v809 = vrot.slane %v808, 2
        %v810 = vadd.f32 %v808, %v809
        %v811 = vrot.slane %v810, 1
        %v812 = vadd.f32 %v810, %v811
        %v813 = vadd.f32 %v781, %v785
        %v814 = vadd.f32 %v813, %v789
        %v815 = vadd.f32 %v814, %v793
        %v816 = vrot.slane %v815, 4
        %v817 = vadd.f32 %v815, %v816
        %v818 = vrot.slane %v817, 2
        %v819 = vadd.f32 %v817, %v818
        %v820 = vrot.slane %v819, 1
        %v821 = vadd.f32 %v819, %v820
        %v822 = vadd.f32 %v782, %v786
        %v823 = vadd.f32 %v822, %v790
        %v824 = vadd.f32 %v823, %v794
        %v825 = vrot.slane %v824, 4
        %v826 = vadd.f32 %v824, %v825
        %v827 = vrot.slane %v826, 2
        %v828 = vadd.f32 %v826, %v827
        %v829 = vrot.slane %v828, 1
        %v830 = vadd.f32 %v828, %v829
        %831 = vset.pattern.permute.xlu0 3
        %832 = vperm.xlu0 %831, %v201
        %v833 = vpop.permute.xlu0 %832
        %v835 = vadd.f32 %v803, %v833
        %v836 = vadd.f32 %v812, %v833
        %v837 = vadd.f32 %v821, %v833
        %v838 = vadd.f32 %v830, %v833
        %v843 = vcombine.low %v835, %v836
        %v844 = vcombine.low %v837, %v838
        %v846 = vunpack.c.l.s4 1966171168
        %v847 = vunpack.c.0.s8 %v846
        %v848 = vlaneseq
        %v849 = vshrl.u32 %v848, 7
        %v850 = vsub.s32 %v847, %v849
        %v851 = vrot.slane %v843, %v850
        %v853 = vunpack.c.l.s4 1966171168
        %v854 = vunpack.c.0.s8 %v853
        %v855 = vlaneseq
        %v856 = vshrl.u32 %v855, 7
        %v857 = vsub.s32 %v854, %v856
        %v858 = vrot.slane %v844, %v857
        %v859 = vcombine.low %v851, %v858
        %v861 = vunpack.c.l.s4 1966171168
        %v862 = vunpack.c.0.s8 %v861
        %v863 = vlaneseq
        %v864 = vshrl.u32 %v863, 7
        %v865 = vsub.s32 %v862, %v864
        %v866 = vrot.slane %v859, %v865
        %v868 = vlaneseq
        %vm869 = vcmp.ge.s32.totalorder %v868, 0
        %vm870 = vcmp.lt.s32.totalorder %v868, 512
        %vm871 = vmand %vm869, %vm870
        %872 = vst.msk [vmem:[%s177] sm:$0xf] %vm871, %v866
        %s873 = sand.u32 %s94, 1
        %s874 = scalar_lea.sflag [#allocation4], %s873
        %s875 = sand.u32 %s94, 1
        %s876 = smul.addr %s875, 4
        %s877 = scalar_lea.vmem [#allocation5], %s876
        // Predicated region
        $region37: #{tpu_custom_call.1} parent=31 // pred_check
          %p878 = pneg %p104
        $region38: #{tpu_custom_call.1} parent=31 // pred_check_branch
          %880 = sbr.rel (%p878) target = $region40
        $region39: #{tpu_custom_call.1} parent=31 // pred_region
          %s881 = smul.u32 4, %s18
          %s883 = ssub.s32 64, 64
          %884 = vsyncadd %s874, %s883
          %s885 = smul.addr %s881, 16
          %s886 = scalar_lea.hbm %s3, %s885
          %s888 = sshll.u32 %s877, 4
          %s889 = int_to_ptr.vmem [resolvable:$true] %s888
          %891 = dma.vmem_to_hbm [thread:$0]  %s889, 64, %s886, %s874
        $region40: #{tpu_custom_call.1} parent=31 // pred_fallthru
          _
      $region32: #{tpu_custom_call.1} parent=5 // pred_fallthru
        _
      %p892 = scmp.le.s32.totalorder 2, %s13
      // Predicated region
      $region41: #{tpu_custom_call.1} parent=5 // pred_check
        %p893 = pneg %p892
      $region42: #{tpu_custom_call.1} parent=5 // pred_check_branch
        %895 = sbr.rel (%p893) target = $region44
      $region43: #{tpu_custom_call.1} parent=5 // pred_region
        %s896 = ssub.s32 %s13, 2
        // Predicated region
        $region45: #{tpu_custom_call.1} parent=43 // pred_check
          %p897 = pneg %p110
        $region46: #{tpu_custom_call.1} parent=43 // pred_check_branch
          %899 = sbr.rel (%p897) target = $region48
        $region47: #{tpu_custom_call.1} parent=43 // pred_region
          %s900 = sand.u32 %s95, 1
          %s901 = scalar_lea.sflag [#allocation4], %s900
          %s902 = sand.u32 %s95, 1
          %s903 = smul.addr %s902, 4
          %s904 = scalar_lea.vmem [#allocation5], %s903
          %905 = dma.done %s901, 64
        $region48: #{tpu_custom_call.1} parent=43 // pred_fallthru
          _
      $region44: #{tpu_custom_call.1} parent=5 // pred_fallthru
        _
    $region6: #{tpu_custom_call.1} parent=1 // loop_footer
      %s17 = sadd.s32 1, %s13
    $region7: #{tpu_custom_call.1} parent=1 // loop_footer_branch
      %12 = sbr.rel target = $region3
    $region8: #{tpu_custom_call.1} parent=1 // loop_exit
      _
    %906 = vsyncpa [#allocation3], 1
    %s907 = scalar_lea.sflag [#allocation3], 1
    %908 = vsyncpa %s907, 1
    %909 = vsyncpa [#allocation4], 1
    %s910 = scalar_lea.sflag [#allocation4], 1
    %911 = vsyncpa %s910, 1

</llo_original>
